<compile_context>
chip_gen: v7x
topology: tpu7x:2x2x1
jax: 0.10.0
libtpu: 0.0.40
codegen_flags: <defaults>
</compile_context>

<pallas_src>
import functools
import math

import jax
import jax.numpy as jnp
from jax.experimental import pallas as pl
from jax.experimental.pallas import tpu as pltpu


def autopad(k, p=None):
    if p is None:
        p = k // 2 if isinstance(k, int) else tuple(x // 2 for x in k)
    return p


def _relu6(y):
    return jnp.minimum(jnp.maximum(y, 0.0), 6.0)


def _cdiv(a, b):
    return -(-a // b)


# ----------------------------------------------------------------------------
# Tile planning (channel / VMEM / occupancy aware).
# ----------------------------------------------------------------------------
_VMEM_LIMIT_BYTES = 32 << 20          # explicit scoped-VMEM limit, legal on v5e/v6e/v7x


@functools.lru_cache(maxsize=None)
def _vmem_block_budget():
    """Per-step block budget (bytes), sized against the smallest gen (v7x: 64 MiB)."""
    try:
        cap = pltpu.get_tpu_info().vmem_capacity_bytes
    except Exception:
        cap = 64 << 20                # conservative: assume v7x
    return min(20 << 20, cap // 3)


def _plan_tiles(B, cin, cout, hw, in_bytes, out_bytes, *,
                lane_target=2048, min_steps=8, max_nb=8):
    """Return (nb images per grid step, lane tile width).

    - tile is either the full H*W (legal full-extent block) or a multiple of 128
    - double-buffered x + out blocks (+ resident weight) stay under the VMEM budget
    - at least ~min_steps grid steps when the problem allows (v7x megacore occupancy)
    - ragged-tile padding minimized among tiles giving the same step count
    """
    budget = _vmem_block_budget()
    w_bytes = 2 * (cout * cin * 2 + cout * 4)            # bf16 W + f32 shift, dbl-buffered
    per_il = 2 * (cin * in_bytes + cout * out_bytes)     # dbl-buffered x + out, per image-lane
    cap = max(128, min(lane_target, (budget - w_bytes) // per_il))

    if hw <= cap:
        # Full H*W rows per step; pack several images when HW is tiny, but keep
        # enough grid steps for both v7x TensorCores.
        nb = max(1, min(B, cap // hw, max_nb))
        if nb > 1:
            nb = min(nb, max(1, B // min_steps))
        steps = _cdiv(B, nb)
        if steps >= min_steps or hw <= 256:
            return nb, hw
        # else fall through: split H*W to create more grid steps.

    # Lane-tiled path, one image per step.
    t_cap = max(128, (min(cap, hw) // 128) * 128)
    need = _cdiv(min_steps, B)                           # hw-tiles wanted per image
    if need > 1 and hw // need >= 128:
        t_cap = min(t_cap, max(128, ((hw // need) // 128) * 128))
    n_tiles = _cdiv(hw, t_cap)
    tile = 128 * _cdiv(_cdiv(hw, n_tiles), 128)          # min ragged padding at this step count
    return 1, tile


# ----------------------------------------------------------------------------
# Pallas kernel: pointwise conv (bf16 MXU matmul, f32 acc) + BN shift + act.
# ----------------------------------------------------------------------------
def _conv_bn_act_kernel(x_ref, w_ref, shift_ref, o_ref, *, act_fn, nb):
    # x_ref:     (nb, Cin, T)   NCHW slab, H*W on the lane axis
    # w_ref:     (Cout, Cin)    bf16, BN scale folded in; constant index map -> stays resident
    # shift_ref: (Cout, 1)      f32, BN shift = beta - running_mean * scale
    # o_ref:     (nb, Cout, T)  lane-dense output (already NCHW layout)
    w = w_ref[...]
    shift = shift_ref[...]
    for i in range(nb):                                   # nb is small & static
        xi = x_ref[i].astype(jnp.bfloat16)                # bf16 operands, f32 accumulate
        y = jnp.dot(w, xi, preferred_element_type=jnp.float32)
        y = y + shift
        if act_fn is not None:
            y = act_fn(y)
        o_ref[i] = y.astype(o_ref.dtype)


@functools.partial(jax.jit, static_argnames=("act_fn", "nb", "tile_hw", "out_dtype"))
def _conv_bn_act(x, w_folded, shift, *, act_fn, nb, tile_hw, out_dtype):
    """x: (B, Cin, H, W) NCHW.  Returns (B, Cout, H, W) in out_dtype."""
    B, cin, H, W = x.shape
    cout = w_folded.shape[0]
    hw = H * W
    x3 = x.reshape(B, cin, hw)                            # free: contiguous collapse
    grid = (pl.cdiv(B, nb), pl.cdiv(hw, tile_hw))

    out3 = pl.pallas_call(
        functools.partial(_conv_bn_act_kernel, act_fn=act_fn, nb=nb),
        out_shape=jax.ShapeDtypeStruct((B, cout, hw), out_dtype),
        grid=grid,
        in_specs=[
            pl.BlockSpec((nb, cin, tile_hw), lambda b, t: (b, 0, t)),
            pl.BlockSpec((cout, cin), lambda b, t: (0, 0)),
            pl.BlockSpec((cout, 1), lambda b, t: (0, 0)),
        ],
        out_specs=pl.BlockSpec((nb, cout, tile_hw), lambda b, t: (b, 0, t)),
        compiler_params=pltpu.CompilerParams(
            dimension_semantics=("parallel", "parallel"),
            vmem_limit_bytes=_VMEM_LIMIT_BYTES),
    )(x3, w_folded, shift)
    return out3.reshape(B, cout, H, W)


# ----------------------------------------------------------------------------
# Conv module: parameters + forward (inference-mode BatchNorm).
# ----------------------------------------------------------------------------
class ConvPallas:
    """YOLOv5 `Conv`: Conv2d(c1, c2, k=1, s=1, bias=False) -> BN -> ReLU6."""

    def __init__(self, c1, c2, k=1, s=1, p=None, g=1, act=True, *, key,
                 bn_eps=1e-5, out_dtype=None):
        # TODO(synk): only the module defaults (k=1, s=1, g=1, pad=0) have an
        # in-kernel path; spatial (k>1), strided, or grouped convs are not
        # implemented here.
        assert k == 1 and s == 1 and g == 1 and autopad(k, p) == 0, (
            "Pallas path implements the pointwise default Conv only")
        self.c1, self.c2 = c1, c2
        self.eps = bn_eps
        self.out_dtype = out_dtype                        # None -> match input dtype
        # PyTorch semantics: True -> ReLU6, callable -> that activation, else identity.
        self.act_fn = _relu6 if act is True else (act if callable(act) else None)

        kw, kg, kb, km, kv = jax.random.split(key, 5)
        # Conv2d weight (Cout, Cin, 1, 1) stored as (Cout, Cin); no conv bias.
        self.weight = jax.random.normal(kw, (c2, c1), jnp.float32) / math.sqrt(c1)
        # BatchNorm2d affine params + running stats (inference mode).
        self.gamma = 1.0 + 0.1 * jax.random.normal(kg, (c2,), jnp.float32)
        self.beta = 0.1 * jax.random.normal(kb, (c2,), jnp.float32)
        self.running_mean = 0.2 * jax.random.normal(km, (c2,), jnp.float32)
        self.running_var = 0.5 + jax.nn.sigmoid(
            jax.random.normal(kv, (c2,), jnp.float32))

        # Fold BN into the conv weight once:  y = (W*scale) @ x + shift
        scale = self.gamma / jnp.sqrt(self.running_var + self.eps)            # (Cout,)
        self.w_folded = (self.weight * scale[:, None]).astype(jnp.bfloat16)   # (Cout, Cin) bf16
        self.shift = (self.beta - self.running_mean * scale)[:, None]         # (Cout, 1) f32

    def __call__(self, x):
        B, _, H, W = x.shape
        out_dtype = jnp.dtype(self.out_dtype) if self.out_dtype is not None \
            else jnp.dtype(x.dtype)
        nb, tile_hw = _plan_tiles(
            B, self.c1, self.c2, H * W,
            jnp.dtype(x.dtype).itemsize, out_dtype.itemsize)
        return _conv_bn_act(x, self.w_folded, self.shift,
                            act_fn=self.act_fn, nb=nb, tile_hw=tile_hw,
                            out_dtype=out_dtype)


# ----------------------------------------------------------------------------
# Pure-JAX reference mirroring the PyTorch eval-mode forward (f32 throughout).
# ----------------------------------------------------------------------------
def reference_forward(m, x):
    x32 = x.astype(jnp.float32)
    y = jnp.einsum("bchw,oc->bohw", x32, m.weight)        # 1x1 conv, no bias
    mean = m.running_mean[None, :, None, None]
    var = m.running_var[None, :, None, None]
    y = (y - mean) / jnp.sqrt(var + m.eps) * m.gamma[None, :, None, None] \
        + m.beta[None, :, None, None]
    if m.act_fn is not None:
        y = m.act_fn(y)
    return y


if __name__ == "__main__":
    key = jax.random.PRNGKey(0)

    # (B, Cin, H, W, Cout, input dtype):
    #   full-HW single step / ragged 128-lane tiles / multi-image-per-step /
    #   bf16 activations through the tiled path.
    cases = [
        (2, 8, 16, 16, 16, jnp.float32),    # HW=256  -> one full-extent tile per image
        (2, 16, 24, 24, 32, jnp.float32),   # HW=576  -> 128-lane tiles, ragged last tile
        (16, 8, 8, 8, 16, jnp.float32),     # HW=64   -> nb=2 images packed per grid step
        (1, 32, 40, 40, 64, jnp.bfloat16),  # HW=1600 -> occupancy-split tiles, bf16 I/O
    ]

    for (B, c1, H, W, c2, dt) in cases:
        key, kp, kx = jax.random.split(key, 3)
        conv = ConvPallas(c1, c2, key=kp)
        x = jax.random.normal(kx, (B, c1, H, W), jnp.float32).astype(dt)

        y = conv(x)
        jax.block_until_ready(y)

        y_ref = reference_forward(conv, x)
        assert y.shape == y_ref.shape == (B, c2, H, W)
        assert y.dtype == x.dtype
        yf = y.astype(jnp.float32)
        max_err = float(jnp.max(jnp.abs(yf - y_ref)))
        assert jnp.allclose(yf, y_ref, rtol=3e-2, atol=5e-2), (
            f"mismatch for case {(B, c1, H, W, c2, dt)}: max abs err {max_err}")

    print("KERNEL_OK")
</pallas_src>

<mosaic_0001>
module attributes {stable_mosaic.version = 11 : i64} {
  func.func @_conv_bn_act_kernel(%arg0: i32, %arg1: i32, %arg2: memref<1x8x256xf32, #tpu.memory_space<vmem>>, %arg3: memref<16x8xbf16, #tpu.memory_space<vmem>>, %arg4: memref<16x1xf32, #tpu.memory_space<vmem>>, %arg5: memref<1x16x256xf32, #tpu.memory_space<vmem>>) attributes {dimension_semantics = [#tpu.dimension_semantics<parallel>, #tpu.dimension_semantics<parallel>], iteration_bounds = array<i64: 2, 1>, scalar_prefetch = 0 : i64, scratch_operands = 0 : i64, tpu.core_type = #tpu.core_type<tc>, window_params = [{transform_indices = @transform_0, window_bounds = array<i64: 1, 8, 256>}, {pipeline_mode = #tpu.pipeline_mode<synchronous>, transform_indices = @transform_1, window_bounds = array<i64: 16, 8>}, {pipeline_mode = #tpu.pipeline_mode<synchronous>, transform_indices = @transform_2, window_bounds = array<i64: 16, 1>}, {transform_indices = @transform_3, window_bounds = array<i64: 1, 16, 256>}]} {
    %c0 = arith.constant 0 : index
    %c0_0 = arith.constant 0 : index
    %0 = vector.load %arg3[%c0, %c0_0] : memref<16x8xbf16, #tpu.memory_space<vmem>>, vector<16x8xbf16>
    %c0_1 = arith.constant 0 : index
    %c0_2 = arith.constant 0 : index
    %1 = vector.load %arg4[%c0_1, %c0_2] : memref<16x1xf32, #tpu.memory_space<vmem>>, vector<16x1xf32>
    %c0_3 = arith.constant 0 : index
    %c0_4 = arith.constant 0 : index
    %c0_5 = arith.constant 0 : index
    %2 = vector.load %arg2[%c0_3, %c0_4, %c0_5] : memref<1x8x256xf32, #tpu.memory_space<vmem>>, vector<1x8x256xf32>
    %3 = vector.shape_cast %2 : vector<1x8x256xf32> to vector<8x256xf32>
    %4 = arith.truncf %3 : vector<8x256xf32> to vector<8x256xbf16>
    %cst = arith.constant dense<0.000000e+00> : vector<16x256xf32>
    %5 = tpu.matmul %0, %4, %cst {dimension_numbers = #tpu.dot_dimension_numbers<[1], [0], [0], [1], [0, 0, 1, 1], [], []>} : vector<16x8xbf16>, vector<8x256xbf16>, vector<16x256xf32> -> vector<16x256xf32>
    %6 = vector.broadcast %1 : vector<16x1xf32> to vector<16x256xf32>
    %7 = arith.addf %5, %6 : vector<16x256xf32>
    %cst_6 = arith.constant 0.000000e+00 : f32
    %8 = vector.broadcast %cst_6 : f32 to vector<16x256xf32>
    %9 = arith.maximumf %7, %8 : vector<16x256xf32>
    %cst_7 = arith.constant 6.000000e+00 : f32
    %10 = vector.broadcast %cst_7 : f32 to vector<16x256xf32>
    %11 = arith.minimumf %9, %10 : vector<16x256xf32>
    %c0_8 = arith.constant 0 : index
    %c0_9 = arith.constant 0 : index
    %c0_10 = arith.constant 0 : index
    %12 = vector.load %arg5[%c0_8, %c0_9, %c0_10] : memref<1x16x256xf32, #tpu.memory_space<vmem>>, vector<1x16x256xf32>
    %13 = vector.shape_cast %12 : vector<1x16x256xf32> to vector<16x256xf32>
    %14 = vector.shape_cast %11 : vector<16x256xf32> to vector<1x16x256xf32>
    tpu.vector_store %arg5[%c0_8, %c0_9, %c0_10], %14 {strides = array<i32>} : memref<1x16x256xf32, #tpu.memory_space<vmem>>, vector<1x16x256xf32>,
    return
  }
  func.func @transform_0(%arg0: i32, %arg1: i32) -> (i32, i32, i32) {
    %c0_i32 = arith.constant 0 : i32
    %c0_i32_0 = arith.constant 0 : i32
    return %arg0, %c0_i32, %arg1 : i32, i32, i32
  }
  func.func @transform_1(%arg0: i32, %arg1: i32) -> (i32, i32) {
    %c0_i32 = arith.constant 0 : i32
    %c0_i32_0 = arith.constant 0 : i32
    %c0_i32_1 = arith.constant 0 : i32
    return %c0_i32, %c0_i32_0 : i32, i32
  }
  func.func @transform_2(%arg0: i32, %arg1: i32) -> (i32, i32) {
    %c0_i32 = arith.constant 0 : i32
    %c0_i32_0 = arith.constant 0 : i32
    %c0_i32_1 = arith.constant 0 : i32
    return %c0_i32, %c0_i32_0 : i32, i32
  }
  func.func @transform_3(%arg0: i32, %arg1: i32) -> (i32, i32, i32) {
    %c0_i32 = arith.constant 0 : i32
    %c0_i32_0 = arith.constant 0 : i32
    return %arg0, %c0_i32, %arg1 : i32, i32, i32
  }
}

</mosaic_0001>

<llo_original>
// kernel: _conv_bn_act.1
$region0: #{_conv_bn_act.1}
  #allocation0 [shape = 'u32[]', space=smem, size = 0x4, offset = 0x4, fixed_abs, tag = 'smem constant byte address 0x4 - core index']
  #allocation1 [shape = 'u32[144,128]{1,0:T(1,128)}', space=vmem, size = 0x12000, scoped, tag = 'internal scratch']
  %s0 = inlined_call_operand.vmem [shape: f32[2,8,256], index: 0, kind: input, shape index: {}]
  %s1 = inlined_call_operand.vmem [shape: bf16[16,8], index: 1, kind: input, shape index: {}]
  %s2 = inlined_call_operand.vmem [shape: f32[16,1], index: 2, kind: input, shape index: {}]
  %s3 = inlined_call_operand.vmem [shape: f32[2,16,256], index: 3, kind: output, shape index: {}]
  %s4 = sld [smem:[#allocation0]]
  $region45: #{_conv_bn_act.1} parent=0
    _
  %s6 = ssub.s32 1, %s4
  %s7 = scalar_select 0, %s6, %s4
  loop: start=0, step=1, limit=4
  $region2: #{_conv_bn_act.1} parent=0 // loop_pre_header
    _
  $region3: #{_conv_bn_act.1} parent=0 // loop_header
    %s9 = sphi 0, %s13
    %p10 = scmp.ge.s32.totalorder %s9, 4
    %s16 = sphi 0, %s28
    %s17 = sphi 0, %s24
    %s18 = sphi 0, %s16
    %s19 = sphi 0, %s17
    %s20 = sphi 0, %s18
    %s21 = sphi 0, %s19
    %s33 = sphi 0, %s35
    %s36 = sphi 0, %s33
    %s37 = sphi 0, %s36
    %s53 = sphi 0, %s37
    %s57 = sphi 0, %s57
    %s59 = sphi 0, %s57
    %s60 = sphi 0, %s59
    %s74 = sphi 0, %s60
    %s78 = sphi 0, %s78
    %s80 = sphi 0, %s78
    %s81 = sphi 0, %s80
    %s95 = sphi 0, %s81
    %s103 = sphi 0, %s105
    %s106 = sphi 0, %s103
    %s107 = sphi 0, %s106
    %s123 = sphi 0, %s107
  $region4: #{_conv_bn_act.1} parent=0 // loop_header_branch
    %12 = sbr.rel (%p10) target = $region8
  $region5: #{_conv_bn_act.1} parent=0 // loop_body
    %s14 = ssub.s32 %s9, 1
    %s15 = ssub.s32 %s9, 2
    %s22 = sadd.s32 1, %s17
    %p23 = scmp.ge.s32.totalorder %s22, 1
    %s24 = scalar_select %p23, 0, %s22
    %s25 = sadd.s32 1, %s16
    %s26 = scalar_select %p23, %s25, %s16
    %p27 = scmp.ge.s32.totalorder %s26, 2
    %s28 = scalar_select %p27, 0, %s26
    %s29 = ssub.s32 %s16, %s28
    %s30 = ssub.s32 %s17, %s24
    %s31 = sor.u32 %s29, %s30
    %p32 = scmp.eq.s32.totalorder %s31, 0
    %s34 = sadd.s32 %s33, 1
    %s35 = scalar_select %p32, %s33, %s34
    %p38 = pneg %p32
    %p39 = scmp.eq.s32.totalorder %s9, 1
    %p40 = por %p38, %p39
    %p41 = scmp.ne.s32.totalorder %s33, %s36
    %p42 = scmp.eq.s32.totalorder %s9, 0
    %p43 = por %p41, %p42
    %p44 = scmp.ne.s32.totalorder %s33, %s36
    %p45 = scmp.eq.s32.totalorder %s14, 1
    %p46 = por %p44, %p45
    %p47 = scmp.ne.s32.totalorder %s36, %s37
    %p48 = scmp.eq.s32.totalorder %s14, 0
    %p49 = por %p47, %p48
    %p50 = scmp.ne.s32.totalorder %s36, %s37
    %p51 = scmp.eq.s32.totalorder %s15, 1
    %p52 = por %p50, %p51
    %p54 = scmp.ne.s32.totalorder %s37, %s53
    %p55 = scmp.eq.s32.totalorder %s15, 0
    %p56 = por %p54, %p55
    %s58 = sadd.s32 %s57, 1
    %p61 = scmp.eq.s32.totalorder %s9, 1
    %p62 = scmp.ne.s32.totalorder %s57, %s59
    %p63 = scmp.eq.s32.totalorder %s9, 0
    %p64 = por %p62, %p63
    %p65 = scmp.ne.s32.totalorder %s57, %s59
    %p66 = scmp.eq.s32.totalorder %s14, 1
    %p67 = por %p65, %p66
    %p68 = scmp.ne.s32.totalorder %s59, %s60
    %p69 = scmp.eq.s32.totalorder %s14, 0
    %p70 = por %p68, %p69
    %p71 = scmp.ne.s32.totalorder %s59, %s60
    %p72 = scmp.eq.s32.totalorder %s15, 1
    %p73 = por %p71, %p72
    %p75 = scmp.ne.s32.totalorder %s60, %s74
    %p76 = scmp.eq.s32.totalorder %s15, 0
    %p77 = por %p75, %p76
    %s79 = sadd.s32 %s78, 1
    %p82 = scmp.eq.s32.totalorder %s9, 1
    %p83 = scmp.ne.s32.totalorder %s78, %s80
    %p84 = scmp.eq.s32.totalorder %s9, 0
    %p85 = por %p83, %p84
    %p86 = scmp.ne.s32.totalorder %s78, %s80
    %p87 = scmp.eq.s32.totalorder %s14, 1
    %p88 = por %p86, %p87
    %p89 = scmp.ne.s32.totalorder %s80, %s81
    %p90 = scmp.eq.s32.totalorder %s14, 0
    %p91 = por %p89, %p90
    %p92 = scmp.ne.s32.totalorder %s80, %s81
    %p93 = scmp.eq.s32.totalorder %s15, 1
    %p94 = por %p92, %p93
    %p96 = scmp.ne.s32.totalorder %s81, %s95
    %p97 = scmp.eq.s32.totalorder %s15, 0
    %p98 = por %p96, %p97
    %s99 = ssub.s32 %s16, %s28
    %s100 = ssub.s32 %s17, %s24
    %s101 = sor.u32 %s99, %s100
    %p102 = scmp.eq.s32.totalorder %s101, 0
    %s104 = sadd.s32 %s103, 1
    %s105 = scalar_select %p102, %s103, %s104
    %p108 = pneg %p102
    %p109 = scmp.eq.s32.totalorder %s9, 1
    %p110 = por %p108, %p109
    %p111 = scmp.ne.s32.totalorder %s103, %s106
    %p112 = scmp.eq.s32.totalorder %s9, 0
    %p113 = por %p111, %p112
    %p114 = scmp.ne.s32.totalorder %s103, %s106
    %p115 = scmp.eq.s32.totalorder %s14, 1
    %p116 = por %p114, %p115
    %p117 = scmp.ne.s32.totalorder %s106, %s107
    %p118 = scmp.eq.s32.totalorder %s14, 0
    %p119 = por %p117, %p118
    %p120 = scmp.ne.s32.totalorder %s106, %s107
    %p121 = scmp.eq.s32.totalorder %s15, 1
    %p122 = por %p120, %p121
    %p124 = scmp.ne.s32.totalorder %s107, %s123
    %p125 = scmp.eq.s32.totalorder %s15, 0
    %p126 = por %p124, %p125
    %p127 = scmp.le.s32.totalorder 1, %s9
    %p128 = scmp.lt.s32.totalorder %s9, 3
    %p129 = pnand %p127, %p128
    %p130 = pneg %p129
    // Predicated region
    $region9: #{_conv_bn_act.1} parent=5 // pred_check
      _
    $region10: #{_conv_bn_act.1} parent=5 // pred_check_branch
      %132 = sbr.rel (%p129) target = $region12
    $region11: #{_conv_bn_act.1} parent=5 // pred_region
      %s133 = ssub.s32 %s9, 1
      // Predicated region
      $region13: #{_conv_bn_act.1} parent=11 // pred_check
        %p134 = pneg %p70
      $region14: #{_conv_bn_act.1} parent=11 // pred_check_branch
        %136 = sbr.rel (%p134) target = $region16
      $region15: #{_conv_bn_act.1} parent=11 // pred_region
        _
      $region16: #{_conv_bn_act.1} parent=11 // pred_fallthru
        _
      // Predicated region
      $region17: #{_conv_bn_act.1} parent=11 // pred_check
        %p137 = pneg %p91
      $region18: #{_conv_bn_act.1} parent=11 // pred_check_branch
        %139 = sbr.rel (%p137) target = $region20
      $region19: #{_conv_bn_act.1} parent=11 // pred_region
        _
      $region20: #{_conv_bn_act.1} parent=11 // pred_fallthru
        _
    $region12: #{_conv_bn_act.1} parent=5 // pred_fallthru
      _
    %p140 = scmp.lt.s32.totalorder %s9, 2
    // Predicated region
    $region21: #{_conv_bn_act.1} parent=5 // pred_check
      %p141 = pneg %p140
    $region22: #{_conv_bn_act.1} parent=5 // pred_check_branch
      %143 = sbr.rel (%p141) target = $region24
    $region23: #{_conv_bn_act.1} parent=5 // pred_region
      // Predicated region
      $region25: #{_conv_bn_act.1} parent=23 // pred_check
        %p144 = pneg %p43
      $region26: #{_conv_bn_act.1} parent=23 // pred_check_branch
        %146 = sbr.rel (%p144) target = $region28
      $region27: #{_conv_bn_act.1} parent=23 // pred_region
        %s147 = smul.u32 2, %s17
        %p148 = scmp.lt.s32.totalorder %s16, 1
        %s149 = scalar_select %p148, %s16, 1
        %p150 = scmp.lt.s32.totalorder %s147, 1
        %s151 = scalar_select %p150, %s147, 1
        %s152 = smul.addr %s149, 2
        %s153 = sadd.s32 %s151, %s152
        %s154 = smul.addr %s153, 8
        %s155 = scalar_lea.vmem %s0, %s154
        %s156 = smul.u32 2, %s17
      $region28: #{_conv_bn_act.1} parent=23 // pred_fallthru
        _
    $region24: #{_conv_bn_act.1} parent=5 // pred_fallthru
      _
    %p157 = scmp.le.s32.totalorder 1, %s9
    %p158 = scmp.lt.s32.totalorder %s9, 3
    %p159 = pnand %p157, %p158
    %p160 = pneg %p159
    // Predicated region
    $region29: #{_conv_bn_act.1} parent=5 // pred_check
      _
    $region30: #{_conv_bn_act.1} parent=5 // pred_check_branch
      %162 = sbr.rel (%p159) target = $region32
    $region31: #{_conv_bn_act.1} parent=5 // pred_region
      %s163 = ssub.s32 %s9, 1
      %s164 = smul.u32 2, %s19
      %p165 = scmp.lt.s32.totalorder %s18, 1
      %s166 = scalar_select %p165, %s18, 1
      %p167 = scmp.lt.s32.totalorder %s164, 1
      %s168 = scalar_select %p167, %s164, 1
      %s169 = smul.addr %s166, 2
      %s170 = sadd.s32 %s168, %s169
      %s171 = smul.addr %s170, 8
      %s172 = scalar_lea.vmem %s0, %s171
      %p173 = pneg %p49
      %p174 = pneg %p46
      %p175 = pneg %p70
      %p176 = pneg %p67
      %p177 = pneg %p91
      %p178 = pneg %p88
      %p179 = pneg %p119
      %p180 = pneg %p116
      %s181 = smul.u32 2, %s19
      %p182 = scmp.lt.s32.totalorder %s18, 1
      %s183 = scalar_select %p182, %s18, 1
      %p184 = scmp.lt.s32.totalorder %s181, 1
      %s185 = scalar_select %p184, %s181, 1
      %s186 = smul.addr %s183, 4
      %s187 = sadd.s32 %s185, %s186
      %s188 = smul.addr %s187, 8
      %s189 = scalar_lea.vmem %s3, %s188
      %s190 = smul.u32 2, %s19
      %p191 = scmp.lt.s32.totalorder %s18, 1
      %s192 = scalar_select %p191, %s18, 1
      %p193 = scmp.lt.s32.totalorder %s190, 1
      %s194 = scalar_select %p193, %s190, 1
      %s195 = smul.addr %s192, 2
      %s196 = sadd.s32 %s194, %s195
      %s197 = smul.addr %s196, 8
      %s198 = scalar_lea.vmem %s0, %s197
      %s199 = smul.u32 2, %s19
      %s200 = smul.u32 2, %s19
      %p201 = scmp.lt.s32.totalorder %s18, 1
      %s202 = scalar_select %p201, %s18, 1
      %p203 = scmp.lt.s32.totalorder %s200, 1
      %s204 = scalar_select %p203, %s200, 1
      %s205 = smul.addr %s202, 4
      %s206 = sadd.s32 %s204, %s205
      %s207 = smul.addr %s206, 8
      %s208 = scalar_lea.vmem %s3, %s207
      %s209 = smul.u32 2, %s19
      %v211 = vld [vmem:[%s1] sm:$0xf]
      %v212 = vld [vmem:[%s1 + $0x4] sm:$0xf]
      %v213 = vld [vmem:[%s2] sm:$0xff]
      %v214 = vld [vmem:[%s2 + $0x8] sm:$0xff]
      %v215 = vld [vmem:[%s198] sm:$0xff]
      %v216 = vld [vmem:[%s198 + $0x8] sm:$0xff]
      %v217 = vpack.c.bf16 %v215, %v215
      %v218 = vpack.c.bf16 %v216, %v216
      %220 = vset.pattern.permute.xlu0 0
      %221 = vperm.xlu0 %220, %v213
      %v222 = vpop.permute.xlu0 %221
      %225 = vset.pattern.permute.xlu0 0
      %226 = vperm.xlu0 %225, %v214
      %v227 = vpop.permute.xlu0 %226
      %v231 = vunpack.c.l.b16 %v211
      %v232 = vunpack.c.l.b16 %v212
      %v233 = vpack.c.b16 %v232, %v231
      %vm234 = vcmask 64512
      %v236 = vsel %vm234, %v233, 0
      %vm238 = vcmask 1043456
      %v240 = vsel %vm238, %v217, 0
      %v243 = vsel %vm238, %v218, 0
      %245 = vmatprep.subr.bf16.mxu0 %v243
      %246 = vmatpush1.bf16.msra.mxu0 %v240
      %247 = vmatprep.subr.bf16.mxu0 0
      %248 = vmatpush1.bf16.msra.mxu0 0
      %249 = vmatprep.subr.bf16.mxu0 0
      %250 = vmatpush1.bf16.msra.mxu0 0
      %251 = vmatprep.subr.bf16.mxu0 0
      %252 = vmatpush1.bf16.msra.mxu0 0
      %253 = vmatprep.subr.bf16.mxu0 0
      %254 = vmatpush1.bf16.msra.mxu0 0
      %255 = vmatprep.subr.bf16.mxu0 0
      %256 = vmatpush1.bf16.msra.mxu0 0
      %257 = vmatprep.subr.bf16.mxu0 0
      %258 = vmatpush1.bf16.msra.mxu0 0
      %259 = vmatprep.subr.bf16.mxu0 0
      %260 = vmatpush1.bf16.msra.mxu0 0
      %261 = vmatprep.subr.bf16.mxu0 0
      %262 = vmatpush1.bf16.msra.mxu0 0
      %263 = vmatprep.subr.bf16.mxu0 0
      %264 = vmatpush1.bf16.msra.mxu0 0
      %265 = vmatprep.subr.bf16.mxu0 0
      %266 = vmatpush1.bf16.msra.mxu0 0
      %267 = vmatprep.subr.bf16.mxu0 0
      %268 = vmatpush1.bf16.msra.mxu0 0
      %269 = vmatprep.subr.bf16.mxu0 0
      %270 = vmatpush1.bf16.msra.mxu0 0
      %271 = vmatprep.subr.bf16.mxu0 0
      %272 = vmatpush1.bf16.msra.mxu0 0
      %273 = vmatprep.subr.bf16.mxu0 0
      %274 = vmatpush1.bf16.msra.mxu0 0
      %275 = vmatprep.subr.bf16.mxu0 0
      %276 = vmatpush1.bf16.msra.mxu0 0
      %277 = vmatprep.mubr.bf16.mxu0 0
      %278 = vmatmul.mubr.bf16.gmra.mrb[0].mxu0 %v236
      %v279 = vpop.f32.mrb[0].mxu0
      %v280 = vadd.f32 %v222, %v279
      %v281 = vpop.f32.mrb[0].mxu0
      %v282 = vadd.f32 %v222, %v281
      %v283 = vpop.f32.mrb[0].mxu0
      %v284 = vadd.f32 %v227, %v283
      %v285 = vpop.f32.mrb[0].mxu0
      %v286 = vadd.f32 %v227, %v285
      %287 = vdwg.mxu0
      %v288 = vmax.f32 %v280, 0.0
      %v289 = vmax.f32 %v282, 0.0
      %v290 = vmax.f32 %v284, 0.0
      %v291 = vmax.f32 %v286, 0.0
      %v292 = vmin.f32 %v288, 6.0
      %v293 = vmin.f32 %v289, 6.0
      %v294 = vmin.f32 %v290, 6.0
      %v295 = vmin.f32 %v291, 6.0
      %296 = vst [vmem:[%s208] sm:$0xff] %v292
      %297 = vst [vmem:[%s208 + $0x8] sm:$0xff] %v293
      %298 = vst [vmem:[%s208 + $0x10] sm:$0xff] %v294
      %299 = vst [vmem:[%s208 + $0x18] sm:$0xff] %v295
      %s300 = smul.u32 2, %s19
      %p301 = scmp.lt.s32.totalorder %s18, 1
      %s302 = scalar_select %p301, %s18, 1
      %p303 = scmp.lt.s32.totalorder %s300, 1
      %s304 = scalar_select %p303, %s300, 1
      %s305 = smul.addr %s302, 4
      %s306 = sadd.s32 %s304, %s305
      %s307 = smul.addr %s306, 8
      %s308 = scalar_lea.vmem %s3, %s307
      // Predicated region
      $region33: #{_conv_bn_act.1} parent=31 // pred_check
        %p309 = pneg %p116
      $region34: #{_conv_bn_act.1} parent=31 // pred_check_branch
        %311 = sbr.rel (%p309) target = $region36
      $region35: #{_conv_bn_act.1} parent=31 // pred_region
        %s312 = smul.u32 2, %s19
      $region36: #{_conv_bn_act.1} parent=31 // pred_fallthru
        _
    $region32: #{_conv_bn_act.1} parent=5 // pred_fallthru
      _
    %p313 = scmp.le.s32.totalorder 2, %s9
    // Predicated region
    $region37: #{_conv_bn_act.1} parent=5 // pred_check
      %p314 = pneg %p313
    $region38: #{_conv_bn_act.1} parent=5 // pred_check_branch
      %316 = sbr.rel (%p314) target = $region40
    $region39: #{_conv_bn_act.1} parent=5 // pred_region
      %s317 = ssub.s32 %s9, 2
      // Predicated region
      $region41: #{_conv_bn_act.1} parent=39 // pred_check
        %p318 = pneg %p122
      $region42: #{_conv_bn_act.1} parent=39 // pred_check_branch
        %320 = sbr.rel (%p318) target = $region44
      $region43: #{_conv_bn_act.1} parent=39 // pred_region
        %s321 = smul.u32 2, %s21
        %p322 = scmp.lt.s32.totalorder %s20, 1
        %s323 = scalar_select %p322, %s20, 1
        %p324 = scmp.lt.s32.totalorder %s321, 1
        %s325 = scalar_select %p324, %s321, 1
        %s326 = smul.addr %s323, 4
        %s327 = sadd.s32 %s325, %s326
        %s328 = smul.addr %s327, 8
        %s329 = scalar_lea.vmem %s3, %s328
      $region44: #{_conv_bn_act.1} parent=39 // pred_fallthru
        _
    $region40: #{_conv_bn_act.1} parent=5 // pred_fallthru
      _
  $region6: #{_conv_bn_act.1} parent=0 // loop_footer
    %s13 = sadd.s32 1, %s9
  $region7: #{_conv_bn_act.1} parent=0 // loop_footer_branch
    %8 = sbr.rel target = $region3
  $region8: #{_conv_bn_act.1} parent=0 // loop_exit
    _

</llo_original>
